<compile_context>
chip_gen: v5e
topology: v5e:2x2
jax: 0.10.0
libtpu: 0.0.40
codegen_flags: <defaults>
</compile_context>

<pallas_src>
import functools
import math

import jax
import jax.numpy as jnp
from jax.experimental import pallas as pl
from jax.experimental.pallas import tpu as pltpu


# ---------------------------------------------------------------------------
# Kernel A: fused Q/K/V projection (qkv_bias=False -> no bias), bf16 MXU,
# scale folded into Q, heads-major bf16 output.
# ---------------------------------------------------------------------------
def qkv_proj_kernel(x_ref, wq_ref, wk_ref, wv_ref, q_ref, k_ref, v_ref,
                    *, num_heads, head_dim, q_scale):
    # bf16 MXU operands with f32 accumulation (weights already arrive bf16).
    x = x_ref[0].astype(jnp.bfloat16)                                # (tp, d_in)

    def proj(w_ref, scale=None):
        # Full-width MXU matmul: contraction = d_in, output = d_out.
        y = jnp.dot(x, w_ref[...], preferred_element_type=jnp.float32)  # (tp, d_out)
        if scale is not None:
            y = y * scale          # fold 1/sqrt(head_dim) into Q (once per element)
        y = y.astype(jnp.bfloat16)
        # Head split: gather lane slices into a heads-major (H, tp, hd) slab and
        # write it with a SINGLE store (no per-head masked ref-store loop).
        return jnp.stack(
            [y[:, h * head_dim:(h + 1) * head_dim] for h in range(num_heads)],
            axis=0)                                                   # (H, tp, hd)

    q_ref[0] = proj(wq_ref, q_scale)
    k_ref[0] = proj(wk_ref)
    v_ref[0] = proj(wv_ref)


# ---------------------------------------------------------------------------
# Kernel B: flash-style attention (heads batched, bf16 MXU operands) + fused
# output projection (per-head batched matmul, no concatenate).
# ---------------------------------------------------------------------------
def flash_mha_kernel(q_ref, k_ref, v_ref, wo_ref, bo_ref, o_ref,
                     m_sc, l_sc, acc_sc, *, num_heads):
    kv_idx = pl.program_id(2)

    @pl.when(kv_idx == 0)
    def _():
        m_sc[...] = jnp.full(m_sc.shape, -jnp.inf, dtype=jnp.float32)
        l_sc[...] = jnp.zeros(l_sc.shape, dtype=jnp.float32)
        acc_sc[...] = jnp.zeros(acc_sc.shape, dtype=jnp.float32)

    q = q_ref[0]                    # (H, tq, hd)  bf16, pre-scaled by 1/sqrt(hd)
    k = k_ref[0]                    # (H, tkv, hd) bf16
    v = v_ref[0]                    # (H, tkv, hd) bf16

    # All heads in one batched dot_general; contraction over head_dim, no
    # explicit K transpose; bf16 operands, f32 accumulation.
    s = jnp.einsum("hqd,hkd->hqk", q, k,
                   preferred_element_type=jnp.float32)               # (H, tq, tkv)
    # NOTE: the reference module's masked_fill is NOT in-place/assigned, so the
    # causal mask is never applied -> softmax over unmasked scores (faithful).

    m_prev = m_sc[...]
    m_new = jnp.maximum(m_prev, jnp.max(s, axis=-1, keepdims=True))  # (H, tq, 1)
    alpha = jnp.exp(m_prev - m_new)
    p = jnp.exp(s - m_new)                                           # (H, tq, tkv)
    l_sc[...] = alpha * l_sc[...] + jnp.sum(p, axis=-1, keepdims=True)
    acc_sc[...] = alpha * acc_sc[...] + jnp.einsum(
        "hqk,hkd->hqd", p.astype(jnp.bfloat16), v,
        preferred_element_type=jnp.float32)                          # (H, tq, hd)
    m_sc[...] = m_new

    @pl.when(kv_idx == pl.num_programs(2) - 1)
    def _():
        # Normalize with the EUP approximate reciprocal (free slot next to exp).
        ctx = acc_sc[...] * pl.reciprocal(l_sc[...], approx=True)    # (H, tq, hd) f32
        ctx_b = ctx.astype(jnp.bfloat16)
        # Fused output projection: per-head batched matmul against the
        # pre-reshaped (H, hd, d_out) weight, then a cheap head-sum.  This
        # replaces the per-head lane-boundary concatenate of the old epilogue.
        per_head = jnp.einsum("hqd,hdo->hqo", ctx_b, wo_ref[...],
                              preferred_element_type=jnp.float32)    # (H, tq, d_out)
        out = jnp.sum(per_head, axis=0) + bo_ref[...]                # (tq, d_out)
        o_ref[0] = out.astype(o_ref.dtype)
        # TODO(synk): training-mode dropout on attention weights not implemented.


def _pick_tile(T, cap):
    """Largest tile <= cap that divides T and keeps the (8,128) rule happy."""
    if T <= cap:
        return T
    t = (cap // 8) * 8
    while t >= 8:
        if T % t == 0:
            return t
        t -= 8
    return T
    # TODO(synk): no padding/masking path for T with no nice divisor (falls back to tile=T).


def _vmem_limit(estimate_bytes):
    """Scoped-VMEM request: real usage + headroom, capped at 64 MiB (v7x-safe)."""
    mib = 1024 * 1024
    return int(max(32 * mib, min(64 * mib, estimate_bytes + 8 * mib)))


def multi_head_attention(x, wq, wk, wv, wo, bo, *, num_heads,
                         q_tile=256, kv_tile=256, proj_tile=256):
    B, T, d_in = x.shape
    d_out = wq.shape[1]
    assert d_out % num_heads == 0
    head_dim = d_out // num_heads

    tp = _pick_tile(T, proj_tile)
    tq = _pick_tile(T, q_tile)
    tkv = _pick_tile(T, kv_tile)

    # bf16 weights for the MXU (f32 accumulation happens inside the kernels).
    wq_b = wq.astype(jnp.bfloat16)
    wk_b = wk.astype(jnp.bfloat16)
    wv_b = wv.astype(jnp.bfloat16)
    # Output-projection weight pre-shaped heads-major in the wrapper (free):
    # wo_r[h, d, :] == wo[h*head_dim + d, :].
    wo_r = wo.reshape(num_heads, head_dim, d_out).astype(jnp.bfloat16)
    bo2 = bo.reshape(1, d_out).astype(jnp.float32)

    q_scale = 1.0 / math.sqrt(head_dim)

    # Grid-invariant weights: single-buffered (default double-buffering would
    # allocate 2 useless copies in VMEM).
    w_spec = pl.BlockSpec((d_in, d_out), lambda b, i: (0, 0),
                          pipeline_mode=pl.Buffered(1))

    # ---- Kernel A: Q/K/V projections into heads-major (B, H, T, hd) bf16 ----
    vmem_a = (2 * tp * d_in * 4                 # x blocks (f32, double-buffered)
              + 3 * d_in * d_out * 2            # bf16 weights, single-buffered
              + 3 * 2 * tp * d_out * 2          # bf16 Q/K/V output blocks, dbl-buf
              + 2 * tp * d_out * 4)             # in-flight f32 matmul result
    q_h, k_h, v_h = pl.pallas_call(
        functools.partial(qkv_proj_kernel, num_heads=num_heads,
                          head_dim=head_dim, q_scale=q_scale),
        out_shape=[jax.ShapeDtypeStruct((B, num_heads, T, head_dim),
                                        jnp.bfloat16)] * 3,
        grid_spec=pltpu.PrefetchScalarGridSpec(
            num_scalar_prefetch=0,
            grid=(B, T // tp),
            in_specs=[
                pl.BlockSpec((1, tp, d_in), lambda b, i: (b, i, 0)),   # x
                w_spec, w_spec, w_spec,                                # wq, wk, wv
            ],
            out_specs=[pl.BlockSpec((1, num_heads, tp, head_dim),
                                    lambda b, i: (b, 0, i, 0))] * 3,
        ),
        compiler_params=pltpu.CompilerParams(
            dimension_semantics=("parallel", "parallel"),
            vmem_limit_bytes=_vmem_limit(vmem_a)),
    )(x, wq_b, wk_b, wv_b)

    # ---- Kernel B: flash attention + fused output projection ---------------
    vmem_b = (2 * num_heads * tq * head_dim * 2          # Q blocks (bf16, dbl-buf)
              + 2 * 2 * num_heads * tkv * head_dim * 2   # K, V blocks
              + num_heads * head_dim * d_out * 2         # wo (bf16, single-buf)
              + d_out * 4                                # bo
              + 2 * tq * d_out * 4                       # out blocks
              + num_heads * tq * (2 + head_dim) * 4      # m, l, acc scratch
              + 2 * num_heads * tq * tkv * 4)            # score/prob temporaries
    out = pl.pallas_call(
        functools.partial(flash_mha_kernel, num_heads=num_heads),
        out_shape=jax.ShapeDtypeStruct((B, T, d_out), x.dtype),
        grid_spec=pltpu.PrefetchScalarGridSpec(
            num_scalar_prefetch=0,
            grid=(B, T // tq, T // tkv),
            in_specs=[
                pl.BlockSpec((1, num_heads, tq, head_dim),
                             lambda b, qi, ki: (b, 0, qi, 0)),         # Q
                pl.BlockSpec((1, num_heads, tkv, head_dim),
                             lambda b, qi, ki: (b, 0, ki, 0)),         # K
                pl.BlockSpec((1, num_heads, tkv, head_dim),
                             lambda b, qi, ki: (b, 0, ki, 0)),         # V
                pl.BlockSpec((num_heads, head_dim, d_out),
                             lambda b, qi, ki: (0, 0, 0),
                             pipeline_mode=pl.Buffered(1)),            # wo_r
                pl.BlockSpec((1, d_out), lambda b, qi, ki: (0, 0),
                             pipeline_mode=pl.Buffered(1)),            # bo
            ],
            out_specs=pl.BlockSpec((1, tq, d_out),
                                   lambda b, qi, ki: (b, qi, 0)),
            scratch_shapes=[
                pltpu.VMEM((num_heads, tq, 1), jnp.float32),          # running max
                pltpu.VMEM((num_heads, tq, 1), jnp.float32),          # running sum
                pltpu.VMEM((num_heads, tq, head_dim), jnp.float32),   # acc
            ],
        ),
        compiler_params=pltpu.CompilerParams(
            dimension_semantics=("parallel", "parallel", "arbitrary"),
            vmem_limit_bytes=_vmem_limit(vmem_b)),
    )(q_h, k_h, v_h, wo_r, bo2)
    return out


def reference_mha(x, wq, wk, wv, wo, bo, *, num_heads):
    B, T, d_in = x.shape
    d_out = wq.shape[1]
    hd = d_out // num_heads
    q = (x @ wq).reshape(B, T, num_heads, hd).transpose(0, 2, 1, 3)
    k = (x @ wk).reshape(B, T, num_heads, hd).transpose(0, 2, 1, 3)
    v = (x @ wv).reshape(B, T, num_heads, hd).transpose(0, 2, 1, 3)
    scores = jnp.einsum("bhqd,bhkd->bhqk", q, k) / math.sqrt(hd)
    attn = jax.nn.softmax(scores, axis=-1)   # mask not applied (matches torch code)
    ctx = jnp.einsum("bhqk,bhkd->bhqd", attn, v).transpose(0, 2, 1, 3).reshape(B, T, d_out)
    return ctx @ wo + bo


if __name__ == "__main__":
    # small shapes: batch=2, seq=8, d_in=32, d_out=32, num_heads=4 (head_dim=8)
    B, T, d_in, d_out, num_heads = 2, 8, 32, 32, 4

    key = jax.random.PRNGKey(0)
    kx, kq, kk, kv, ko, kb = jax.random.split(key, 6)

    x = jax.random.normal(kx, (B, T, d_in), dtype=jnp.float32)
    wq = jax.random.normal(kq, (d_in, d_out), dtype=jnp.float32) * 0.1
    wk = jax.random.normal(kk, (d_in, d_out), dtype=jnp.float32) * 0.1
    wv = jax.random.normal(kv, (d_in, d_out), dtype=jnp.float32) * 0.1
    wo = jax.random.normal(ko, (d_out, d_out), dtype=jnp.float32) * 0.1
    bo = jax.random.normal(kb, (1, d_out), dtype=jnp.float32) * 0.1

    out = multi_head_attention(x, wq, wk, wv, wo, bo, num_heads=num_heads)
    out = jax.block_until_ready(out)

    ref = reference_mha(x, wq, wk, wv, wo, bo, num_heads=num_heads)
    assert out.shape == (B, T, d_out)
    # Tolerance loosened because the MXU is fed bf16 operands (f32 accumulation)
    # and the softmax denominator uses the EUP approximate reciprocal.
    assert jnp.allclose(out, ref, atol=5e-2, rtol=5e-2), "mismatch vs reference"

    print("KERNEL_OK")
</pallas_src>

<mosaic_0001>
module attributes {stable_mosaic.version = 11 : i64} {
  func.func @qkv_proj_kernel(%arg0: i32, %arg1: i32, %arg2: memref<1x8x32xf32, #tpu.memory_space<vmem>>, %arg3: memref<32x32xbf16, #tpu.memory_space<vmem>>, %arg4: memref<32x32xbf16, #tpu.memory_space<vmem>>, %arg5: memref<32x32xbf16, #tpu.memory_space<vmem>>, %arg6: memref<1x4x8x8xbf16, #tpu.memory_space<vmem>>, %arg7: memref<1x4x8x8xbf16, #tpu.memory_space<vmem>>, %arg8: memref<1x4x8x8xbf16, #tpu.memory_space<vmem>>) attributes {dimension_semantics = [#tpu.dimension_semantics<parallel>, #tpu.dimension_semantics<parallel>], iteration_bounds = array<i64: 2, 1>, scalar_prefetch = 0 : i64, scratch_operands = 0 : i64, tpu.core_type = #tpu.core_type<tc>, window_params = [{transform_indices = @transform_0, window_bounds = array<i64: 1, 8, 32>}, {pipeline_mode = #tpu.pipeline_mode<synchronous>, transform_indices = @transform_1, window_bounds = array<i64: 32, 32>}, {pipeline_mode = #tpu.pipeline_mode<synchronous>, transform_indices = @transform_2, window_bounds = array<i64: 32, 32>}, {pipeline_mode = #tpu.pipeline_mode<synchronous>, transform_indices = @transform_3, window_bounds = array<i64: 32, 32>}, {transform_indices = @transform_4, window_bounds = array<i64: 1, 4, 8, 8>}, {transform_indices = @transform_5, window_bounds = array<i64: 1, 4, 8, 8>}, {transform_indices = @transform_6, window_bounds = array<i64: 1, 4, 8, 8>}]} {
    %c0 = arith.constant 0 : index
    %c0_0 = arith.constant 0 : index
    %c0_1 = arith.constant 0 : index
    %0 = vector.load %arg2[%c0, %c0_0, %c0_1] : memref<1x8x32xf32, #tpu.memory_space<vmem>>, vector<1x8x32xf32>
    %1 = vector.shape_cast %0 : vector<1x8x32xf32> to vector<8x32xf32>
    %2 = arith.truncf %1 : vector<8x32xf32> to vector<8x32xbf16>
    %c0_2 = arith.constant 0 : index
    %c0_3 = arith.constant 0 : index
    %3 = vector.load %arg3[%c0_2, %c0_3] : memref<32x32xbf16, #tpu.memory_space<vmem>>, vector<32x32xbf16>
    %cst = arith.constant dense<0.000000e+00> : vector<8x32xf32>
    %4 = tpu.matmul %2, %3, %cst {dimension_numbers = #tpu.dot_dimension_numbers<[1], [0], [0], [1], [0, 0, 1, 1], [], []>} : vector<8x32xbf16>, vector<32x32xbf16>, vector<8x32xf32> -> vector<8x32xf32>
    %cst_4 = arith.constant 0.353553385 : f32
    %5 = vector.broadcast %cst_4 : f32 to vector<8x32xf32>
    %6 = arith.mulf %4, %5 : vector<8x32xf32>
    %7 = arith.truncf %6 : vector<8x32xf32> to vector<8x32xbf16>
    %8 = vector.extract_strided_slice %7 {offsets = [0, 0], sizes = [8, 8], strides = [1, 1]} : vector<8x32xbf16> to vector<8x8xbf16>
    %9 = vector.extract_strided_slice %7 {offsets = [0, 8], sizes = [8, 8], strides = [1, 1]} : vector<8x32xbf16> to vector<8x8xbf16>
    %10 = vector.extract_strided_slice %7 {offsets = [0, 16], sizes = [8, 8], strides = [1, 1]} : vector<8x32xbf16> to vector<8x8xbf16>
    %11 = vector.extract_strided_slice %7 {offsets = [0, 24], sizes = [8, 8], strides = [1, 1]} : vector<8x32xbf16> to vector<8x8xbf16>
    %12 = vector.shape_cast %8 : vector<8x8xbf16> to vector<1x8x8xbf16>
    %13 = vector.shape_cast %9 : vector<8x8xbf16> to vector<1x8x8xbf16>
    %14 = vector.shape_cast %10 : vector<8x8xbf16> to vector<1x8x8xbf16>
    %15 = vector.shape_cast %11 : vector<8x8xbf16> to vector<1x8x8xbf16>
    %16 = tpu.concatenate %12, %13, %14, %15 in 0 : vector<1x8x8xbf16>, vector<1x8x8xbf16>, vector<1x8x8xbf16>, vector<1x8x8xbf16> -> vector<4x8x8xbf16>
    %c0_5 = arith.constant 0 : index
    %c0_6 = arith.constant 0 : index
    %c0_7 = arith.constant 0 : index
    %c0_8 = arith.constant 0 : index
    %17 = vector.load %arg6[%c0_5, %c0_6, %c0_7, %c0_8] : memref<1x4x8x8xbf16, #tpu.memory_space<vmem>>, vector<1x4x8x8xbf16>
    %18 = vector.shape_cast %17 : vector<1x4x8x8xbf16> to vector<4x8x8xbf16>
    %19 = vector.shape_cast %16 : vector<4x8x8xbf16> to vector<1x4x8x8xbf16>
    tpu.vector_store %arg6[%c0_5, %c0_6, %c0_7, %c0_8], %19 {strides = array<i32>} : memref<1x4x8x8xbf16, #tpu.memory_space<vmem>>, vector<1x4x8x8xbf16>,
    %c0_9 = arith.constant 0 : index
    %c0_10 = arith.constant 0 : index
    %20 = vector.load %arg4[%c0_9, %c0_10] : memref<32x32xbf16, #tpu.memory_space<vmem>>, vector<32x32xbf16>
    %cst_11 = arith.constant dense<0.000000e+00> : vector<8x32xf32>
    %21 = tpu.matmul %2, %20, %cst_11 {dimension_numbers = #tpu.dot_dimension_numbers<[1], [0], [0], [1], [0, 0, 1, 1], [], []>} : vector<8x32xbf16>, vector<32x32xbf16>, vector<8x32xf32> -> vector<8x32xf32>
    %22 = arith.truncf %21 : vector<8x32xf32> to vector<8x32xbf16>
    %23 = vector.extract_strided_slice %22 {offsets = [0, 0], sizes = [8, 8], strides = [1, 1]} : vector<8x32xbf16> to vector<8x8xbf16>
    %24 = vector.extract_strided_slice %22 {offsets = [0, 8], sizes = [8, 8], strides = [1, 1]} : vector<8x32xbf16> to vector<8x8xbf16>
    %25 = vector.extract_strided_slice %22 {offsets = [0, 16], sizes = [8, 8], strides = [1, 1]} : vector<8x32xbf16> to vector<8x8xbf16>
    %26 = vector.extract_strided_slice %22 {offsets = [0, 24], sizes = [8, 8], strides = [1, 1]} : vector<8x32xbf16> to vector<8x8xbf16>
    %27 = vector.shape_cast %23 : vector<8x8xbf16> to vector<1x8x8xbf16>
    %28 = vector.shape_cast %24 : vector<8x8xbf16> to vector<1x8x8xbf16>
    %29 = vector.shape_cast %25 : vector<8x8xbf16> to vector<1x8x8xbf16>
    %30 = vector.shape_cast %26 : vector<8x8xbf16> to vector<1x8x8xbf16>
    %31 = tpu.concatenate %27, %28, %29, %30 in 0 : vector<1x8x8xbf16>, vector<1x8x8xbf16>, vector<1x8x8xbf16>, vector<1x8x8xbf16> -> vector<4x8x8xbf16>
    %c0_12 = arith.constant 0 : index
    %c0_13 = arith.constant 0 : index
    %c0_14 = arith.constant 0 : index
    %c0_15 = arith.constant 0 : index
    %32 = vector.load %arg7[%c0_12, %c0_13, %c0_14, %c0_15] : memref<1x4x8x8xbf16, #tpu.memory_space<vmem>>, vector<1x4x8x8xbf16>
    %33 = vector.shape_cast %32 : vector<1x4x8x8xbf16> to vector<4x8x8xbf16>
    %34 = vector.shape_cast %31 : vector<4x8x8xbf16> to vector<1x4x8x8xbf16>
    tpu.vector_store %arg7[%c0_12, %c0_13, %c0_14, %c0_15], %34 {strides = array<i32>} : memref<1x4x8x8xbf16, #tpu.memory_space<vmem>>, vector<1x4x8x8xbf16>,
    %c0_16 = arith.constant 0 : index
    %c0_17 = arith.constant 0 : index
    %35 = vector.load %arg5[%c0_16, %c0_17] : memref<32x32xbf16, #tpu.memory_space<vmem>>, vector<32x32xbf16>
    %cst_18 = arith.constant dense<0.000000e+00> : vector<8x32xf32>
    %36 = tpu.matmul %2, %35, %cst_18 {dimension_numbers = #tpu.dot_dimension_numbers<[1], [0], [0], [1], [0, 0, 1, 1], [], []>} : vector<8x32xbf16>, vector<32x32xbf16>, vector<8x32xf32> -> vector<8x32xf32>
    %37 = arith.truncf %36 : vector<8x32xf32> to vector<8x32xbf16>
    %38 = vector.extract_strided_slice %37 {offsets = [0, 0], sizes = [8, 8], strides = [1, 1]} : vector<8x32xbf16> to vector<8x8xbf16>
    %39 = vector.extract_strided_slice %37 {offsets = [0, 8], sizes = [8, 8], strides = [1, 1]} : vector<8x32xbf16> to vector<8x8xbf16>
    %40 = vector.extract_strided_slice %37 {offsets = [0, 16], sizes = [8, 8], strides = [1, 1]} : vector<8x32xbf16> to vector<8x8xbf16>
    %41 = vector.extract_strided_slice %37 {offsets = [0, 24], sizes = [8, 8], strides = [1, 1]} : vector<8x32xbf16> to vector<8x8xbf16>
    %42 = vector.shape_cast %38 : vector<8x8xbf16> to vector<1x8x8xbf16>
    %43 = vector.shape_cast %39 : vector<8x8xbf16> to vector<1x8x8xbf16>
    %44 = vector.shape_cast %40 : vector<8x8xbf16> to vector<1x8x8xbf16>
    %45 = vector.shape_cast %41 : vector<8x8xbf16> to vector<1x8x8xbf16>
    %46 = tpu.concatenate %42, %43, %44, %45 in 0 : vector<1x8x8xbf16>, vector<1x8x8xbf16>, vector<1x8x8xbf16>, vector<1x8x8xbf16> -> vector<4x8x8xbf16>
    %c0_19 = arith.constant 0 : index
    %c0_20 = arith.constant 0 : index
    %c0_21 = arith.constant 0 : index
    %c0_22 = arith.constant 0 : index
    %47 = vector.load %arg8[%c0_19, %c0_20, %c0_21, %c0_22] : memref<1x4x8x8xbf16, #tpu.memory_space<vmem>>, vector<1x4x8x8xbf16>
    %48 = vector.shape_cast %47 : vector<1x4x8x8xbf16> to vector<4x8x8xbf16>
    %49 = vector.shape_cast %46 : vector<4x8x8xbf16> to vector<1x4x8x8xbf16>
    tpu.vector_store %arg8[%c0_19, %c0_20, %c0_21, %c0_22], %49 {strides = array<i32>} : memref<1x4x8x8xbf16, #tpu.memory_space<vmem>>, vector<1x4x8x8xbf16>,
    return
  }
  func.func @transform_0(%arg0: i32, %arg1: i32) -> (i32, i32, i32) {
    %c0_i32 = arith.constant 0 : i32
    %c0_i32_0 = arith.constant 0 : i32
    return %arg0, %arg1, %c0_i32 : i32, i32, i32
  }
  func.func @transform_1(%arg0: i32, %arg1: i32) -> (i32, i32) {
    %c0_i32 = arith.constant 0 : i32
    %c0_i32_0 = arith.constant 0 : i32
    %c0_i32_1 = arith.constant 0 : i32
    return %c0_i32, %c0_i32_0 : i32, i32
  }
  func.func @transform_2(%arg0: i32, %arg1: i32) -> (i32, i32) {
    %c0_i32 = arith.constant 0 : i32
    %c0_i32_0 = arith.constant 0 : i32
    %c0_i32_1 = arith.constant 0 : i32
    return %c0_i32, %c0_i32_0 : i32, i32
  }
  func.func @transform_3(%arg0: i32, %arg1: i32) -> (i32, i32) {
    %c0_i32 = arith.constant 0 : i32
    %c0_i32_0 = arith.constant 0 : i32
    %c0_i32_1 = arith.constant 0 : i32
    return %c0_i32, %c0_i32_0 : i32, i32
  }
  func.func @transform_4(%arg0: i32, %arg1: i32) -> (i32, i32, i32, i32) {
    %c0_i32 = arith.constant 0 : i32
    %c0_i32_0 = arith.constant 0 : i32
    %c0_i32_1 = arith.constant 0 : i32
    return %arg0, %c0_i32, %arg1, %c0_i32_0 : i32, i32, i32, i32
  }
  func.func @transform_5(%arg0: i32, %arg1: i32) -> (i32, i32, i32, i32) {
    %c0_i32 = arith.constant 0 : i32
    %c0_i32_0 = arith.constant 0 : i32
    %c0_i32_1 = arith.constant 0 : i32
    return %arg0, %c0_i32, %arg1, %c0_i32_0 : i32, i32, i32, i32
  }
  func.func @transform_6(%arg0: i32, %arg1: i32) -> (i32, i32, i32, i32) {
    %c0_i32 = arith.constant 0 : i32
    %c0_i32_0 = arith.constant 0 : i32
    %c0_i32_1 = arith.constant 0 : i32
    return %arg0, %c0_i32, %arg1, %c0_i32_0 : i32, i32, i32, i32
  }
}

</mosaic_0001>

<llo_original>
// kernel: tpu_custom_call.1
$region0: #{tpu_custom_call.1}
  #allocation0 [shape = 'u32[]', space=smem, size = 0x4, offset = 0x4, fixed_abs, tag = 'smem constant byte address 0x4 - core index']
  #allocation1 [shape = 'u32[72,128]{1,0:T(1,128)}', space=vmem, size = 0x9000, scoped, tag = 'internal scratch']
  %s0 = inlined_call_operand.hbm [shape: f32[2,8,32], index: 0, kind: input, shape index: {}]
  %s1 = inlined_call_operand.hbm [shape: bf16[32,32], index: 1, kind: input, shape index: {}]
  %s2 = inlined_call_operand.hbm [shape: bf16[32,32], index: 2, kind: input, shape index: {}]
  %s3 = inlined_call_operand.hbm [shape: bf16[32,32], index: 3, kind: input, shape index: {}]
  %s4 = inlined_call_operand.hbm [shape: bf16[2,4,8,8], index: 4, kind: output, shape index: {0}]
  %s5 = inlined_call_operand.hbm [shape: bf16[2,4,8,8], index: 5, kind: output, shape index: {1}]
  %s6 = inlined_call_operand.hbm [shape: bf16[2,4,8,8], index: 6, kind: output, shape index: {2}]
  %7 = xla_tuple %s4, %s5, %s6
  %s8 = sld [smem:[#allocation0]]
  $region81: #{tpu_custom_call.1} parent=0
    _
  %s10 = ssub.s32 1, %s8
  %s11 = scalar_select 0, %s10, %s8
  $region1: #{tpu_custom_call.1} parent=0
    #allocation2 [shape = 'u8[8192]{0}', space=vmem, size = 0x2000, scoped, tag = 'input window, operand 0']
    #allocation3 [shape = 's32[2]{0}', space=sflag, size = 0x8, scoped, tag = 'scoped memory for tpu_custom_call.1']
    #allocation4 [shape = 's32[2]{0}', space=sflag, size = 0x8, scoped, tag = 'scoped memory for tpu_custom_call.1']
    #allocation5 [shape = 'u8[8192]{0}', space=vmem, size = 0x2000, scoped, tag = 'input window, operand 1, single buffered']
    #allocation6 [shape = 's32[1]{0}', space=sflag, size = 0x4, scoped, tag = 'scoped memory for tpu_custom_call.1']
    #allocation7 [shape = 'u8[8192]{0}', space=vmem, size = 0x2000, scoped, tag = 'input window, operand 2, single buffered']
    #allocation8 [shape = 'u8[8192]{0}', space=vmem, size = 0x2000, scoped, tag = 'input window, operand 3, single buffered']
    #allocation9 [shape = 's32[1]{0}', space=sflag, size = 0x4, scoped, tag = 'scoped memory for tpu_custom_call.1']
    #allocation10 [shape = 'u8[16384]{0}', space=vmem, size = 0x4000, scoped, tag = 'output window, operand 0']
    #allocation11 [shape = 'u8[16384]{0}', space=vmem, size = 0x4000, scoped, tag = 'output window, operand 1']
    #allocation12 [shape = 's32[2]{0}', space=sflag, size = 0x8, scoped, tag = 'scoped memory for tpu_custom_call.1']
    #allocation13 [shape = 'u8[16384]{0}', space=vmem, size = 0x4000, scoped, tag = 'output window, operand 2']
    %12 = vsyncpa [#allocation3], 0
    %s13 = scalar_lea.sflag [#allocation3], 1
    %14 = vsyncpa %s13, 0
    %15 = vsyncpa [#allocation6], 0
    %16 = vsyncpa [#allocation9], 0
    %17 = vsyncpa [#allocation4], 0
    %s18 = scalar_lea.sflag [#allocation4], 1
    %19 = vsyncpa %s18, 0
    %20 = vsyncpa [#allocation12], 0
    %s21 = scalar_lea.sflag [#allocation12], 1
    %22 = vsyncpa %s21, 0
    loop: start=0, step=1, limit=4
    $region2: #{tpu_custom_call.1} parent=1 // loop_pre_header
      _
    $region3: #{tpu_custom_call.1} parent=1 // loop_header
      %s24 = sphi 0, %s28
      %p25 = scmp.ge.s32.totalorder %s24, 4
      %s31 = sphi 0, %s43
      %s32 = sphi 0, %s39
      %s33 = sphi 0, %s31
      %s34 = sphi 0, %s32
      %s35 = sphi 0, %s33
      %s36 = sphi 0, %s34
      %s48 = sphi 0, %s50
      %s51 = sphi 0, %s48
      %s52 = sphi 0, %s51
      %s68 = sphi 0, %s52
      %s72 = sphi 0, %s72
      %s74 = sphi 0, %s72
      %s75 = sphi 0, %s74
      %s89 = sphi 0, %s75
      %s93 = sphi 0, %s93
      %s95 = sphi 0, %s93
      %s96 = sphi 0, %s95
      %s110 = sphi 0, %s96
      %s114 = sphi 0, %s114
      %s116 = sphi 0, %s114
      %s117 = sphi 0, %s116
      %s131 = sphi 0, %s117
      %s139 = sphi 0, %s141
      %s142 = sphi 0, %s139
      %s143 = sphi 0, %s142
      %s159 = sphi 0, %s143
      %s167 = sphi 0, %s169
      %s170 = sphi 0, %s167
      %s171 = sphi 0, %s170
      %s187 = sphi 0, %s171
      %s195 = sphi 0, %s197
      %s198 = sphi 0, %s195
      %s199 = sphi 0, %s198
      %s215 = sphi 0, %s199
    $region4: #{tpu_custom_call.1} parent=1 // loop_header_branch
      %27 = sbr.rel (%p25) target = $region8
    $region5: #{tpu_custom_call.1} parent=1 // loop_body
      %s29 = ssub.s32 %s24, 1
      %s30 = ssub.s32 %s24, 2
      %s37 = sadd.s32 1, %s32
      %p38 = scmp.ge.s32.totalorder %s37, 1
      %s39 = scalar_select %p38, 0, %s37
      %s40 = sadd.s32 1, %s31
      %s41 = scalar_select %p38, %s40, %s31
      %p42 = scmp.ge.s32.totalorder %s41, 2
      %s43 = scalar_select %p42, 0, %s41
      %s44 = ssub.s32 %s31, %s43
      %s45 = ssub.s32 %s32, %s39
      %s46 = sor.u32 %s44, %s45
      %p47 = scmp.eq.s32.totalorder %s46, 0
      %s49 = sadd.s32 %s48, 1
      %s50 = scalar_select %p47, %s48, %s49
      %p53 = pneg %p47
      %p54 = scmp.eq.s32.totalorder %s24, 1
      %p55 = por %p53, %p54
      %p56 = scmp.ne.s32.totalorder %s48, %s51
      %p57 = scmp.eq.s32.totalorder %s24, 0
      %p58 = por %p56, %p57
      %p59 = scmp.ne.s32.totalorder %s48, %s51
      %p60 = scmp.eq.s32.totalorder %s29, 1
      %p61 = por %p59, %p60
      %p62 = scmp.ne.s32.totalorder %s51, %s52
      %p63 = scmp.eq.s32.totalorder %s29, 0
      %p64 = por %p62, %p63
      %p65 = scmp.ne.s32.totalorder %s51, %s52
      %p66 = scmp.eq.s32.totalorder %s30, 1
      %p67 = por %p65, %p66
      %p69 = scmp.ne.s32.totalorder %s52, %s68
      %p70 = scmp.eq.s32.totalorder %s30, 0
      %p71 = por %p69, %p70
      %s73 = sadd.s32 %s72, 1
      %p76 = scmp.eq.s32.totalorder %s24, 1
      %p77 = scmp.ne.s32.totalorder %s72, %s74
      %p78 = scmp.eq.s32.totalorder %s24, 0
      %p79 = por %p77, %p78
      %p80 = scmp.ne.s32.totalorder %s72, %s74
      %p81 = scmp.eq.s32.totalorder %s29, 1
      %p82 = por %p80, %p81
      %p83 = scmp.ne.s32.totalorder %s74, %s75
      %p84 = scmp.eq.s32.totalorder %s29, 0
      %p85 = por %p83, %p84
      %p86 = scmp.ne.s32.totalorder %s74, %s75
      %p87 = scmp.eq.s32.totalorder %s30, 1
      %p88 = por %p86, %p87
      %p90 = scmp.ne.s32.totalorder %s75, %s89
      %p91 = scmp.eq.s32.totalorder %s30, 0
      %p92 = por %p90, %p91
      %s94 = sadd.s32 %s93, 1
      %p97 = scmp.eq.s32.totalorder %s24, 1
      %p98 = scmp.ne.s32.totalorder %s93, %s95
      %p99 = scmp.eq.s32.totalorder %s24, 0
      %p100 = por %p98, %p99
      %p101 = scmp.ne.s32.totalorder %s93, %s95
      %p102 = scmp.eq.s32.totalorder %s29, 1
      %p103 = por %p101, %p102
      %p104 = scmp.ne.s32.totalorder %s95, %s96
      %p105 = scmp.eq.s32.totalorder %s29, 0
      %p106 = por %p104, %p105
      %p107 = scmp.ne.s32.totalorder %s95, %s96
      %p108 = scmp.eq.s32.totalorder %s30, 1
      %p109 = por %p107, %p108
      %p111 = scmp.ne.s32.totalorder %s96, %s110
      %p112 = scmp.eq.s32.totalorder %s30, 0
      %p113 = por %p111, %p112
      %s115 = sadd.s32 %s114, 1
      %p118 = scmp.eq.s32.totalorder %s24, 1
      %p119 = scmp.ne.s32.totalorder %s114, %s116
      %p120 = scmp.eq.s32.totalorder %s24, 0
      %p121 = por %p119, %p120
      %p122 = scmp.ne.s32.totalorder %s114, %s116
      %p123 = scmp.eq.s32.totalorder %s29, 1
      %p124 = por %p122, %p123
      %p125 = scmp.ne.s32.totalorder %s116, %s117
      %p126 = scmp.eq.s32.totalorder %s29, 0
      %p127 = por %p125, %p126
      %p128 = scmp.ne.s32.totalorder %s116, %s117
      %p129 = scmp.eq.s32.totalorder %s30, 1
      %p130 = por %p128, %p129
      %p132 = scmp.ne.s32.totalorder %s117, %s131
      %p133 = scmp.eq.s32.totalorder %s30, 0
      %p134 = por %p132, %p133
      %s135 = ssub.s32 %s31, %s43
      %s136 = ssub.s32 %s32, %s39
      %s137 = sor.u32 %s135, %s136
      %p138 = scmp.eq.s32.totalorder %s137, 0
      %s140 = sadd.s32 %s139, 1
      %s141 = scalar_select %p138, %s139, %s140
      %p144 = pneg %p138
      %p145 = scmp.eq.s32.totalorder %s24, 1
      %p146 = por %p144, %p145
      %p147 = scmp.ne.s32.totalorder %s139, %s142
      %p148 = scmp.eq.s32.totalorder %s24, 0
      %p149 = por %p147, %p148
      %p150 = scmp.ne.s32.totalorder %s139, %s142
      %p151 = scmp.eq.s32.totalorder %s29, 1
      %p152 = por %p150, %p151
      %p153 = scmp.ne.s32.totalorder %s142, %s143
      %p154 = scmp.eq.s32.totalorder %s29, 0
      %p155 = por %p153, %p154
      %p156 = scmp.ne.s32.totalorder %s142, %s143
      %p157 = scmp.eq.s32.totalorder %s30, 1
      %p158 = por %p156, %p157
      %p160 = scmp.ne.s32.totalorder %s143, %s159
      %p161 = scmp.eq.s32.totalorder %s30, 0
      %p162 = por %p160, %p161
      %s163 = ssub.s32 %s31, %s43
      %s164 = ssub.s32 %s32, %s39
      %s165 = sor.u32 %s163, %s164
      %p166 = scmp.eq.s32.totalorder %s165, 0
      %s168 = sadd.s32 %s167, 1
      %s169 = scalar_select %p166, %s167, %s168
      %p172 = pneg %p166
      %p173 = scmp.eq.s32.totalorder %s24, 1
      %p174 = por %p172, %p173
      %p175 = scmp.ne.s32.totalorder %s167, %s170
      %p176 = scmp.eq.s32.totalorder %s24, 0
      %p177 = por %p175, %p176
      %p178 = scmp.ne.s32.totalorder %s167, %s170
      %p179 = scmp.eq.s32.totalorder %s29, 1
      %p180 = por %p178, %p179
      %p181 = scmp.ne.s32.totalorder %s170, %s171
      %p182 = scmp.eq.s32.totalorder %s29, 0
      %p183 = por %p181, %p182
      %p184 = scmp.ne.s32.totalorder %s170, %s171
      %p185 = scmp.eq.s32.totalorder %s30, 1
      %p186 = por %p184, %p185
      %p188 = scmp.ne.s32.totalorder %s171, %s187
      %p189 = scmp.eq.s32.totalorder %s30, 0
      %p190 = por %p188, %p189
      %s191 = ssub.s32 %s31, %s43
      %s192 = ssub.s32 %s32, %s39
      %s193 = sor.u32 %s191, %s192
      %p194 = scmp.eq.s32.totalorder %s193, 0
      %s196 = sadd.s32 %s195, 1
      %s197 = scalar_select %p194, %s195, %s196
      %p200 = pneg %p194
      %p201 = scmp.eq.s32.totalorder %s24, 1
      %p202 = por %p200, %p201
      %p203 = scmp.ne.s32.totalorder %s195, %s198
      %p204 = scmp.eq.s32.totalorder %s24, 0
      %p205 = por %p203, %p204
      %p206 = scmp.ne.s32.totalorder %s195, %s198
      %p207 = scmp.eq.s32.totalorder %s29, 1
      %p208 = por %p206, %p207
      %p209 = scmp.ne.s32.totalorder %s198, %s199
      %p210 = scmp.eq.s32.totalorder %s29, 0
      %p211 = por %p209, %p210
      %p212 = scmp.ne.s32.totalorder %s198, %s199
      %p213 = scmp.eq.s32.totalorder %s30, 1
      %p214 = por %p212, %p213
      %p216 = scmp.ne.s32.totalorder %s199, %s215
      %p217 = scmp.eq.s32.totalorder %s30, 0
      %p218 = por %p216, %p217
      %p219 = scmp.le.s32.totalorder 1, %s24
      %p220 = scmp.lt.s32.totalorder %s24, 3
      %p221 = pnand %p219, %p220
      %p222 = pneg %p221
      // Predicated region
      $region9: #{tpu_custom_call.1} parent=5 // pred_check
        _
      $region10: #{tpu_custom_call.1} parent=5 // pred_check_branch
        %224 = sbr.rel (%p221) target = $region12
      $region11: #{tpu_custom_call.1} parent=5 // pred_region
        %s225 = ssub.s32 %s24, 1
        // Predicated region
        $region13: #{tpu_custom_call.1} parent=11 // pred_check
          %p226 = pneg %p85
        $region14: #{tpu_custom_call.1} parent=11 // pred_check_branch
          %228 = sbr.rel (%p226) target = $region16
        $region15: #{tpu_custom_call.1} parent=11 // pred_region
          %230 = vsyncadd [#allocation6], 0
          %s231 = sshll.u32 %s1, 4
          %s232 = int_to_ptr.hbm [resolvable:$true] %s231
          %s233 = sshll.u32 [#allocation5], 4
          %s234 = int_to_ptr.vmem [resolvable:$true] %s233
          %239 = dma.hbm_to_vmem [thread:$0]  %s232, 256, %s234, [#allocation6], 64, 64, 4
        $region16: #{tpu_custom_call.1} parent=11 // pred_fallthru
          _
        // Predicated region
        $region17: #{tpu_custom_call.1} parent=11 // pred_check
          %p240 = pneg %p106
        $region18: #{tpu_custom_call.1} parent=11 // pred_check_branch
          %242 = sbr.rel (%p240) target = $region20
        $region19: #{tpu_custom_call.1} parent=11 // pred_region
          %244 = vsyncadd [#allocation6], 0
          %s245 = sshll.u32 %s2, 4
          %s246 = int_to_ptr.hbm [resolvable:$true] %s245
          %s247 = sshll.u32 [#allocation7], 4
          %s248 = int_to_ptr.vmem [resolvable:$true] %s247
          %253 = dma.hbm_to_vmem [thread:$0]  %s246, 256, %s248, [#allocation6], 64, 64, 4
        $region20: #{tpu_custom_call.1} parent=11 // pred_fallthru
          _
        // Predicated region
        $region21: #{tpu_custom_call.1} parent=11 // pred_check
          %p254 = pneg %p127
        $region22: #{tpu_custom_call.1} parent=11 // pred_check_branch
          %256 = sbr.rel (%p254) target = $region24
        $region23: #{tpu_custom_call.1} parent=11 // pred_region
          %258 = vsyncadd [#allocation9], 0
          %s259 = sshll.u32 %s3, 4
          %s260 = int_to_ptr.hbm [resolvable:$true] %s259
          %s261 = sshll.u32 [#allocation8], 4
          %s262 = int_to_ptr.vmem [resolvable:$true] %s261
          %267 = dma.hbm_to_vmem [thread:$0]  %s260, 256, %s262, [#allocation9], 64, 64, 4
        $region24: #{tpu_custom_call.1} parent=11 // pred_fallthru
          _
      $region12: #{tpu_custom_call.1} parent=5 // pred_fallthru
        _
      %p268 = scmp.lt.s32.totalorder %s24, 2
      // Predicated region
      $region25: #{tpu_custom_call.1} parent=5 // pred_check
        %p269 = pneg %p268
      $region26: #{tpu_custom_call.1} parent=5 // pred_check_branch
        %271 = sbr.rel (%p269) target = $region28
      $region27: #{tpu_custom_call.1} parent=5 // pred_region
        // Predicated region
        $region29: #{tpu_custom_call.1} parent=27 // pred_check
          %p272 = pneg %p58
        $region30: #{tpu_custom_call.1} parent=27 // pred_check_branch
          %274 = sbr.rel (%p272) target = $region32
        $region31: #{tpu_custom_call.1} parent=27 // pred_region
          %s275 = sand.u32 %s48, 1
          %s276 = scalar_lea.sflag [#allocation3], %s275
          %s277 = sand.u32 %s48, 1
          %s278 = smul.addr %s277, 8
          %s279 = scalar_lea.vmem [#allocation2], %s278
          %281 = vsyncadd %s276, 0
          %s282 = sadd.s32 %s32, %s31
          %s283 = smul.addr %s282, 8
          %s284 = scalar_lea.hbm %s0, %s283
          %s286 = sshll.u32 %s284, 4
          %s287 = int_to_ptr.hbm [resolvable:$true] %s286
          %s288 = sshll.u32 %s279, 4
          %s289 = int_to_ptr.vmem [resolvable:$true] %s288
          %291 = dma.hbm_to_vmem [thread:$0]  %s287, 128, %s289, %s276
        $region32: #{tpu_custom_call.1} parent=27 // pred_fallthru
          _
      $region28: #{tpu_custom_call.1} parent=5 // pred_fallthru
        _
      %p292 = scmp.le.s32.totalorder 1, %s24
      %p293 = scmp.lt.s32.totalorder %s24, 3
      %p294 = pnand %p292, %p293
      %p295 = pneg %p294
      // Predicated region
      $region33: #{tpu_custom_call.1} parent=5 // pred_check
        _
      $region34: #{tpu_custom_call.1} parent=5 // pred_check_branch
        %297 = sbr.rel (%p294) target = $region36
      $region35: #{tpu_custom_call.1} parent=5 // pred_region
        %s298 = ssub.s32 %s24, 1
        %s299 = sand.u32 %s51, 1
        %s300 = scalar_lea.sflag [#allocation3], %s299
        %s301 = sand.u32 %s51, 1
        %s302 = smul.addr %s301, 8
        %s303 = scalar_lea.vmem [#allocation2], %s302
        // Predicated region
        $region37: #{tpu_custom_call.1} parent=35 // pred_check
          %p304 = pneg %p64
        $region38: #{tpu_custom_call.1} parent=35 // pred_check_branch
          %306 = sbr.rel (%p304) target = $region40
        $region39: #{tpu_custom_call.1} parent=35 // pred_region
          %308 = dma.done %s300, 128
        $region40: #{tpu_custom_call.1} parent=35 // pred_fallthru
          _
        // Predicated region
        $region41: #{tpu_custom_call.1} parent=35 // pred_check
          %p309 = pneg %p85
        $region42: #{tpu_custom_call.1} parent=35 // pred_check_branch
          %311 = sbr.rel (%p309) target = $region44
        $region43: #{tpu_custom_call.1} parent=35 // pred_region
          %313 = dma.done [#allocation6], 256
        $region44: #{tpu_custom_call.1} parent=35 // pred_fallthru
          _
        // Predicated region
        $region45: #{tpu_custom_call.1} parent=35 // pred_check
          %p314 = pneg %p106
        $region46: #{tpu_custom_call.1} parent=35 // pred_check_branch
          %316 = sbr.rel (%p314) target = $region48
        $region47: #{tpu_custom_call.1} parent=35 // pred_region
          %318 = dma.done [#allocation6], 256
        $region48: #{tpu_custom_call.1} parent=35 // pred_fallthru
          _
        // Predicated region
        $region49: #{tpu_custom_call.1} parent=35 // pred_check
          %p319 = pneg %p127
        $region50: #{tpu_custom_call.1} parent=35 // pred_check_branch
          %321 = sbr.rel (%p319) target = $region52
        $region51: #{tpu_custom_call.1} parent=35 // pred_region
          %323 = dma.done [#allocation9], 256
        $region52: #{tpu_custom_call.1} parent=35 // pred_fallthru
          _
        %s324 = sand.u32 %s51, 1
        %s325 = scalar_lea.sflag [#allocation3], %s324
        %s326 = sand.u32 %s51, 1
        %s327 = smul.addr %s326, 8
        %s328 = scalar_lea.vmem [#allocation2], %s327
        %p329 = pneg %p64
        %p330 = pneg %p61
        %p331 = pneg %p85
        %p332 = pneg %p82
        %p333 = pneg %p106
        %p334 = pneg %p103
        %p335 = pneg %p127
        %p336 = pneg %p124
        %p337 = pneg %p155
        %p338 = pneg %p152
        %s339 = sand.u32 %s142, 1
        %s340 = scalar_lea.sflag [#allocation4], %s339
        %s341 = sand.u32 %s142, 1
        %s342 = smul.addr %s341, 16
        %s343 = scalar_lea.vmem [#allocation10], %s342
        %p344 = pneg %p183
        %p345 = pneg %p180
        %s346 = sand.u32 %s29, 1
        %s347 = scalar_lea.sflag [#allocation12], %s346
        %s348 = sand.u32 %s170, 1
        %s349 = smul.addr %s348, 16
        %s350 = scalar_lea.vmem [#allocation11], %s349
        %p351 = pneg %p211
        %p352 = pneg %p208
        %s353 = sand.u32 %s29, 1
        %s354 = scalar_lea.sflag [#allocation12], %s353
        %s355 = sand.u32 %s198, 1
        %s356 = smul.addr %s355, 16
        %s357 = scalar_lea.vmem [#allocation13], %s356
        %v359 = vld [vmem:[%s303] sm:$0xff]
        %v360 = vpack.c.bf16 %v359, %v359
        %v361 = vld [vmem:[#allocation5] sm:$0xf]
        %v362 = vld [vmem:[#allocation5 + $0x4] sm:$0xf]
        %v363 = vld [vmem:[#allocation5 + $0x8] sm:$0xf]
        %v364 = vld [vmem:[#allocation5 + $0xc] sm:$0xf]
        %v369 = vunpack.c.l.b16 %v361
        %v370 = vunpack.c.l.b16 %v362
        %v371 = vunpack.c.l.b16 %v363
        %v372 = vunpack.c.l.b16 %v364
        %v373 = vpack.c.b16 %v370, %v369
        %v374 = vpack.c.b16 %v372, %v371
        %vm377 = vcmask 261120
        %v379 = vsel %vm377, %v360, 0
        %381 = vmatpush.bf16.msra.mxu0 0
        %382 = vmatpush.bf16.msra.mxu0 0
        %383 = vmatpush.bf16.msra.mxu0 0
        %384 = vmatpush.bf16.msra.mxu0 0
        %385 = vmatpush.bf16.msra.mxu0 0
        %386 = vmatpush.bf16.msra.mxu0 0
        %387 = vmatpush.bf16.msra.mxu0 %v374
        %388 = vmatpush.bf16.msra.mxu0 %v373
        %389 = vmatmul.bf16.gmra.mxu0 %v379
        %v390 = vpop.f32.mrf.mxu0
        %v391 = vadd.f32 0.0, %v390
        %v392 = vpop.f32.mrf.mxu0
        %393 = vdwg.mxu0
        %v394 = vmul.f32 %v391, 0.35355338
        %v395 = vpack.c.bf16 %v394, %v394
        %397 = vrot.lane.b32.xlu0 %v395, 120
        %v398 = vpop.permute.xlu0 %397
        %400 = vrot.lane.b32.xlu0 %v395, 112
        %v401 = vpop.permute.xlu0 %400
        %403 = vrot.lane.b32.xlu0 %v395, 104
        %v404 = vpop.permute.xlu0 %403
        %vm406 = vcmask 60416
        %407 = vst.msk [vmem:[%s343] sm:$0xf] %vm406, %v395
        %408 = vst.msk [vmem:[%s343 + $0x4] sm:$0xf] %vm406, %v398
        %409 = vst.msk [vmem:[%s343 + $0x8] sm:$0xf] %vm406, %v401
        %410 = vst.msk [vmem:[%s343 + $0xc] sm:$0xf] %vm406, %v404
        %v411 = vld [vmem:[#allocation7] sm:$0xf]
        %v412 = vld [vmem:[#allocation7 + $0x4] sm:$0xf]
        %v413 = vld [vmem:[#allocation7 + $0x8] sm:$0xf]
        %v414 = vld [vmem:[#allocation7 + $0xc] sm:$0xf]
        %v419 = vunpack.c.l.b16 %v411
        %v420 = vunpack.c.l.b16 %v412
        %v421 = vunpack.c.l.b16 %v413
        %v422 = vunpack.c.l.b16 %v414
        %v423 = vpack.c.b16 %v420, %v419
        %v424 = vpack.c.b16 %v422, %v421
        %427 = vmatpush.bf16.msra.mxu0 0
        %428 = vmatpush.bf16.msra.mxu0 0
        %429 = vmatpush.bf16.msra.mxu0 0
        %430 = vmatpush.bf16.msra.mxu0 0
        %431 = vmatpush.bf16.msra.mxu0 0
        %432 = vmatpush.bf16.msra.mxu0 0
        %433 = vmatpush.bf16.msra.mxu0 %v424
        %434 = vmatpush.bf16.msra.mxu0 %v423
        %435 = vmatmul.bf16.gmra.mxu0 %v379
        %v436 = vpop.f32.mrf.mxu0
        %v437 = vadd.f32 0.0, %v436
        %v438 = vpop.f32.mrf.mxu0
        %439 = vdwg.mxu0
        %v440 = vpack.c.bf16 %v437, %v437
        %442 = vrot.lane.b32.xlu0 %v440, 120
        %v443 = vpop.permute.xlu0 %442
        %445 = vrot.lane.b32.xlu0 %v440, 112
        %v446 = vpop.permute.xlu0 %445
        %448 = vrot.lane.b32.xlu0 %v440, 104
        %v449 = vpop.permute.xlu0 %448
        %451 = vst.msk [vmem:[%s350] sm:$0xf] %vm406, %v440
        %452 = vst.msk [vmem:[%s350 + $0x4] sm:$0xf] %vm406, %v443
        %453 = vst.msk [vmem:[%s350 + $0x8] sm:$0xf] %vm406, %v446
        %454 = vst.msk [vmem:[%s350 + $0xc] sm:$0xf] %vm406, %v449
        %v455 = vld [vmem:[#allocation8] sm:$0xf]
        %v456 = vld [vmem:[#allocation8 + $0x4] sm:$0xf]
        %v457 = vld [vmem:[#allocation8 + $0x8] sm:$0xf]
        %v458 = vld [vmem:[#allocation8 + $0xc] sm:$0xf]
        %v463 = vunpack.c.l.b16 %v455
        %v464 = vunpack.c.l.b16 %v456
        %v465 = vunpack.c.l.b16 %v457
        %v466 = vunpack.c.l.b16 %v458
        %v467 = vpack.c.b16 %v464, %v463
        %v468 = vpack.c.b16 %v466, %v465
        %471 = vmatpush.bf16.msra.mxu0 0
        %472 = vmatpush.bf16.msra.mxu0 0
        %473 = vmatpush.bf16.msra.mxu0 0
        %474 = vmatpush.bf16.msra.mxu0 0
        %475 = vmatpush.bf16.msra.mxu0 0
        %476 = vmatpush.bf16.msra.mxu0 0
        %477 = vmatpush.bf16.msra.mxu0 %v468
        %478 = vmatpush.bf16.msra.mxu0 %v467
        %479 = vmatmul.bf16.gmra.mxu0 %v379
        %v480 = vpop.f32.mrf.mxu0
        %v481 = vadd.f32 0.0, %v480
        %v482 = vpop.f32.mrf.mxu0
        %483 = vdwg.mxu0
        %v484 = vpack.c.bf16 %v481, %v481
        %486 = vrot.lane.b32.xlu0 %v484, 120
        %v487 = vpop.permute.xlu0 %486
        %489 = vrot.lane.b32.xlu0 %v484, 112
        %v490 = vpop.permute.xlu0 %489
        %492 = vrot.lane.b32.xlu0 %v484, 104
        %v493 = vpop.permute.xlu0 %492
        %495 = vst.msk [vmem:[%s357] sm:$0xf] %vm406, %v484
        %496 = vst.msk [vmem:[%s357 + $0x4] sm:$0xf] %vm406, %v487
        %497 = vst.msk [vmem:[%s357 + $0x8] sm:$0xf] %vm406, %v490
        %498 = vst.msk [vmem:[%s357 + $0xc] sm:$0xf] %vm406, %v493
        %s499 = sand.u32 %s142, 1
        %s500 = scalar_lea.sflag [#allocation4], %s499
        %s501 = sand.u32 %s142, 1
        %s502 = smul.addr %s501, 16
        %s503 = scalar_lea.vmem [#allocation10], %s502
        %s504 = sand.u32 %s29, 1
        %s505 = scalar_lea.sflag [#allocation12], %s504
        %s506 = sand.u32 %s170, 1
        %s507 = smul.addr %s506, 16
        %s508 = scalar_lea.vmem [#allocation11], %s507
        %s509 = sand.u32 %s29, 1
        %s510 = scalar_lea.sflag [#allocation12], %s509
        %s511 = sand.u32 %s198, 1
        %s512 = smul.addr %s511, 16
        %s513 = scalar_lea.vmem [#allocation13], %s512
        // Predicated region
        $region53: #{tpu_custom_call.1} parent=35 // pred_check
          %p514 = pneg %p152
        $region54: #{tpu_custom_call.1} parent=35 // pred_check_branch
          %516 = sbr.rel (%p514) target = $region56
        $region55: #{tpu_custom_call.1} parent=35 // pred_region
          %518 = vsyncadd %s500, 0
          %s519 = smul.addr %s33, 4
          %s520 = sadd.s32 %s34, %s519
          %s521 = smul.addr %s520, 4
          %s522 = scalar_lea.hbm %s4, %s521
          %s523 = sshll.u32 %s503, 4
          %s524 = int_to_ptr.vmem [resolvable:$true] %s523
          %s525 = sshll.u32 %s522, 4
          %s526 = int_to_ptr.hbm [resolvable:$true] %s525
          %531 = dma.vmem_to_hbm [thread:$0]  %s524, 256, %s526, %s500, 64, 64, 4
        $region56: #{tpu_custom_call.1} parent=35 // pred_fallthru
          _
        // Predicated region
        $region57: #{tpu_custom_call.1} parent=35 // pred_check
          %p532 = pneg %p180
        $region58: #{tpu_custom_call.1} parent=35 // pred_check_branch
          %534 = sbr.rel (%p532) target = $region60
        $region59: #{tpu_custom_call.1} parent=35 // pred_region
          %536 = vsyncadd %s505, 0
          %s537 = smul.addr %s33, 4
          %s538 = sadd.s32 %s34, %s537
          %s539 = smul.addr %s538, 4
          %s540 = scalar_lea.hbm %s5, %s539
          %s541 = sshll.u32 %s508, 4
          %s542 = int_to_ptr.vmem [resolvable:$true] %s541
          %s543 = sshll.u32 %s540, 4
          %s544 = int_to_ptr.hbm [resolvable:$true] %s543
          %549 = dma.vmem_to_hbm [thread:$0]  %s542, 256, %s544, %s505, 64, 64, 4
        $region60: #{tpu_custom_call.1} parent=35 // pred_fallthru
          _
        // Predicated region
        $region61: #{tpu_custom_call.1} parent=35 // pred_check
          %p550 = pneg %p208
        $region62: #{tpu_custom_call.1} parent=35 // pred_check_branch
          %552 = sbr.rel (%p550) target = $region64
        $region63: #{tpu_custom_call.1} parent=35 // pred_region
          %554 = vsyncadd %s510, 0
          %s555 = smul.addr %s33, 4
          %s556 = sadd.s32 %s34, %s555
          %s557 = smul.addr %s556, 4
          %s558 = scalar_lea.hbm %s6, %s557
          %s559 = sshll.u32 %s513, 4
          %s560 = int_to_ptr.vmem [resolvable:$true] %s559
          %s561 = sshll.u32 %s558, 4
          %s562 = int_to_ptr.hbm [resolvable:$true] %s561
          %567 = dma.vmem_to_hbm [thread:$0]  %s560, 256, %s562, %s510, 64, 64, 4
        $region64: #{tpu_custom_call.1} parent=35 // pred_fallthru
          _
      $region36: #{tpu_custom_call.1} parent=5 // pred_fallthru
        _
      %p568 = scmp.le.s32.totalorder 2, %s24
      // Predicated region
      $region65: #{tpu_custom_call.1} parent=5 // pred_check
        %p569 = pneg %p568
      $region66: #{tpu_custom_call.1} parent=5 // pred_check_branch
        %571 = sbr.rel (%p569) target = $region68
      $region67: #{tpu_custom_call.1} parent=5 // pred_region
        %s572 = ssub.s32 %s24, 2
        // Predicated region
        $region69: #{tpu_custom_call.1} parent=67 // pred_check
          %p573 = pneg %p158
        $region70: #{tpu_custom_call.1} parent=67 // pred_check_branch
          %575 = sbr.rel (%p573) target = $region72
        $region71: #{tpu_custom_call.1} parent=67 // pred_region
          %s576 = sand.u32 %s143, 1
          %s577 = scalar_lea.sflag [#allocation4], %s576
          %s578 = sand.u32 %s143, 1
          %s579 = smul.addr %s578, 16
          %s580 = scalar_lea.vmem [#allocation10], %s579
          %582 = dma.done %s577, 256
        $region72: #{tpu_custom_call.1} parent=67 // pred_fallthru
          _
        // Predicated region
        $region73: #{tpu_custom_call.1} parent=67 // pred_check
          %p583 = pneg %p186
        $region74: #{tpu_custom_call.1} parent=67 // pred_check_branch
          %585 = sbr.rel (%p583) target = $region76
        $region75: #{tpu_custom_call.1} parent=67 // pred_region
          %s586 = sand.u32 %s30, 1
          %s587 = scalar_lea.sflag [#allocation12], %s586
          %s588 = sand.u32 %s171, 1
          %s589 = smul.addr %s588, 16
          %s590 = scalar_lea.vmem [#allocation11], %s589
          %592 = dma.done %s587, 256
        $region76: #{tpu_custom_call.1} parent=67 // pred_fallthru
          _
        // Predicated region
        $region77: #{tpu_custom_call.1} parent=67 // pred_check
          %p593 = pneg %p214
        $region78: #{tpu_custom_call.1} parent=67 // pred_check_branch
          %595 = sbr.rel (%p593) target = $region80
        $region79: #{tpu_custom_call.1} parent=67 // pred_region
          %s596 = sand.u32 %s30, 1
          %s597 = scalar_lea.sflag [#allocation12], %s596
          %s598 = sand.u32 %s199, 1
          %s599 = smul.addr %s598, 16
          %s600 = scalar_lea.vmem [#allocation13], %s599
          %602 = dma.done %s597, 256
        $region80: #{tpu_custom_call.1} parent=67 // pred_fallthru
          _
      $region68: #{tpu_custom_call.1} parent=5 // pred_fallthru
        _
    $region6: #{tpu_custom_call.1} parent=1 // loop_footer
      %s28 = sadd.s32 1, %s24
    $region7: #{tpu_custom_call.1} parent=1 // loop_footer_branch
      %23 = sbr.rel target = $region3
    $region8: #{tpu_custom_call.1} parent=1 // loop_exit
      _
    %603 = vsyncpa [#allocation3], 1
    %s604 = scalar_lea.sflag [#allocation3], 1
    %605 = vsyncpa %s604, 1
    %606 = vsyncpa [#allocation6], 1
    %607 = vsyncpa [#allocation9], 1
    %608 = vsyncpa [#allocation4], 1
    %s609 = scalar_lea.sflag [#allocation4], 1
    %610 = vsyncpa %s609, 1
    %611 = vsyncpa [#allocation12], 1
    %s612 = scalar_lea.sflag [#allocation12], 1
    %613 = vsyncpa %s612, 1

</llo_original>
